<compile_context>
chip_gen: v7x
topology: tpu7x:2x2x1
jax: 0.10.0
libtpu: 0.0.40
codegen_flags: <defaults>
</compile_context>

<pallas_src>
import functools

import numpy as np
import jax
import jax.numpy as jnp
from jax.experimental import pallas as pl
from jax.experimental.pallas import tpu as pltpu


def _round_up(a, b):
  return ((a + b - 1) // b) * b


# ----------------------------------------------------------------------------
# Fused Pallas kernel: grid = (node-row tiles, nonzero adjacency-column tiles).
# ----------------------------------------------------------------------------

def _gcnss_kernel(ktab_ref, kcnt_ref,                 # scalar prefetch (SMEM)
                  adj_ref, xw_ref, poolg_ref, linw_ref, outbias_ref,
                  out_ref,
                  h_acc, pooled_acc):
  i = pl.program_id(0)            # node-row tile
  k = pl.program_id(1)            # adjacency-column tile slot (data-dependent)
  nk = pl.num_programs(1)

  @pl.when((i == 0) & (k == 0))
  def _init_pooled():
    pooled_acc[...] = jnp.zeros_like(pooled_acc)

  @pl.when(k == 0)
  def _init_rows():
    h_acc[...] = jnp.zeros_like(h_acc)

  # Neighbor aggregation + relational transform in one MXU pass:
  #   h[r, :] += sum_c adj[r, c] * (x @ W_rel)[c, :]
  # Only k slots that map to a nonzero adjacency block contribute.
  @pl.when(k < kcnt_ref[i])
  def _accum():
    h_acc[...] += jnp.dot(adj_ref[...], xw_ref[...],
                          preferred_element_type=jnp.float32)

  @pl.when(k == nk - 1)
  def _pool():
    # global_mean_pool, accumulated across row tiles:
    #   pooled[g, :] += sum_r poolg[g, r] * h[r, :]
    pooled_acc[...] += jnp.dot(poolg_ref[...], h_acc[...],
                               preferred_element_type=jnp.float32)

  @pl.when((i == pl.num_programs(0) - 1) & (k == nk - 1))
  def _finalize():
    # Dropout(p=0.5, training=False) == identity.  out_bias already holds
    # (pool @ x @ W_root + b_rel) @ lin_W + lin_b.
    out_ref[...] = (jnp.dot(pooled_acc[...], linw_ref[...],
                            preferred_element_type=jnp.float32)
                    + outbias_ref[...])


# ----------------------------------------------------------------------------
# Wrapper: densify edges (bf16), fold small linear ops out of the loop,
# build the block-diagonal skip table, launch the fused kernel.
# NOTE: called with concrete (non-traced) edge_index — the graph's block
# structure determines the grid, so do not wrap this function in jax.jit.
# ----------------------------------------------------------------------------

def gcnss_forward(params, x, edge_index, batch, num_graphs,
                  *, tile_m=256, tile_k=512):
  N, fin = x.shape
  H = params['W_rel'].shape[1]
  n_cls = params['lin_W'].shape[1]
  G = int(num_graphs)
  Gp = _round_up(G, 8)                      # sublane-pad the graph axis

  # Row (destination-node) tiling: multiple of 8 sublanes.
  tile_m = _round_up(max(8, min(tile_m, _round_up(N, 8))), 8)
  n_rows = _round_up(N, tile_m)
  # Column (source-node) tiling: multiple of 128 lanes.
  tile_k = _round_up(max(128, min(tile_k, _round_up(N, 128))), 128)
  n_cols = _round_up(N, tile_k)

  num_row_tiles = n_rows // tile_m
  num_col_tiles = n_cols // tile_k

  # ---- Host-side block-diagonal skip table (numpy; edge_index is concrete).
  src_np = np.asarray(edge_index[0])
  dst_np = np.asarray(edge_index[1])
  blk_mask = np.zeros((num_row_tiles, num_col_tiles), dtype=bool)
  if src_np.size:
    blk_mask[dst_np // tile_m, src_np // tile_k] = True
  kcnt_np = blk_mask.sum(axis=1).astype(np.int32)                 # [rows]
  max_k = max(int(kcnt_np.max()) if kcnt_np.size else 0, 1)
  ktab_np = np.zeros((num_row_tiles, max_k), dtype=np.int32)
  for r in range(num_row_tiles):
    nz = np.flatnonzero(blk_mask[r])
    ktab_np[r, :nz.size] = nz
  ktab = jnp.asarray(ktab_np.reshape(-1))                         # flat SMEM table
  kcnt = jnp.asarray(kcnt_np)

  # ---- Device-side precompute (all tiny except the adjacency itself).
  src = jnp.asarray(edge_index[0])
  dst = jnp.asarray(edge_index[1])
  # Dense adjacency adj[dst, src] += 1, built directly in bf16 (counts exact
  # up to 256, matching PyG add-aggregation for multigraphs).
  adj = jnp.zeros((n_rows, n_cols), jnp.bfloat16).at[dst, src].add(
      jnp.ones(dst.shape, jnp.bfloat16))

  # Fold W_rel into the streamed operand: h_rel = adj @ (x @ W_rel).
  xw = (jnp.pad(x, ((0, n_cols - N), (0, 0))) @ params['W_rel']
        ).astype(jnp.bfloat16)                                    # [n_cols, H]

  batch = jnp.asarray(batch)
  one_hot = (batch[:, None] == jnp.arange(G)[None, :]).astype(jnp.float32)
  counts = jnp.maximum(jnp.sum(one_hot, axis=0), 1.0)             # [G]
  poolg = one_hot.T / counts[:, None]                             # [G, N]
  poolg_pad = jnp.zeros((Gp, n_rows), jnp.float32).at[:G, :N].set(poolg)

  # Root transform + biases folded through the (linear) mean-pool and
  # classifier into a per-graph output bias.
  pooled_root = poolg @ x                                         # [G, fin]
  out_bias = ((pooled_root @ params['W_root'] + params['b_rel'][None, :])
              @ params['lin_W'] + params['lin_b'][None, :])       # [G, n_cls]
  out_bias_pad = jnp.zeros((Gp, n_cls), jnp.float32).at[:G].set(out_bias)

  grid = (num_row_tiles, max_k)

  out = pl.pallas_call(
      _gcnss_kernel,
      grid_spec=pltpu.PrefetchScalarGridSpec(
          num_scalar_prefetch=2,
          grid=grid,
          in_specs=[
              # adjacency row tile, column block chosen from the skip table
              pl.BlockSpec((tile_m, tile_k),
                           lambda i, k, ktab, kcnt: (i, ktab[i * max_k + k])),
              # matching slab of x @ W_rel (bf16)
              pl.BlockSpec((tile_k, H),
                           lambda i, k, ktab, kcnt: (ktab[i * max_k + k], 0)),
              # transposed mean-pool matrix, row tile
              pl.BlockSpec((Gp, tile_m),
                           lambda i, k, ktab, kcnt: (0, i)),
              # classifier weight (resident)
              pl.BlockSpec((H, n_cls), lambda i, k, ktab, kcnt: (0, 0)),
              # folded per-graph output bias (resident)
              pl.BlockSpec((Gp, n_cls), lambda i, k, ktab, kcnt: (0, 0)),
          ],
          out_specs=pl.BlockSpec((Gp, n_cls), lambda i, k, ktab, kcnt: (0, 0)),
          scratch_shapes=[
              pltpu.VMEM((tile_m, H), jnp.float32),   # per-row-tile h accumulator
              pltpu.VMEM((Gp, H), jnp.float32),       # pooled accumulator
          ],
      ),
      out_shape=jax.ShapeDtypeStruct((Gp, n_cls), jnp.float32),
      compiler_params=pltpu.CompilerParams(
          # accumulators carried across both axes -> both "arbitrary"
          dimension_semantics=("arbitrary", "arbitrary"),
          # safe on v7x's 64 MiB physical VMEM; can be raised on v5e/v6e
          vmem_limit_bytes=64 * 1024 * 1024,
      ),
  )(ktab, kcnt, adj, xw, poolg_pad, params['lin_W'], out_bias_pad)

  return out[:G]


# ----------------------------------------------------------------------------
# Pure-JAX reference (correctness check) and parameter construction.
# ----------------------------------------------------------------------------

def gcnss_reference(params, x, edge_index, batch, num_graphs):
  N = x.shape[0]
  adj = jnp.zeros((N, N), jnp.float32).at[edge_index[1], edge_index[0]].add(1.0)
  agg = adj @ x
  h = agg @ params['W_rel'] + x @ params['W_root'] + params['b_rel'][None, :]
  one_hot = (batch[:, None] == jnp.arange(num_graphs)[None, :]).astype(jnp.float32)
  pool = (one_hot / jnp.sum(one_hot, axis=0, keepdims=True)).T    # [G, N]
  pooled = pool @ h
  return pooled @ params['lin_W'] + params['lin_b'][None, :]


def make_params(key, hidden_channels, number_of_features, number_of_classes):
  def uinit(k, shape, fan_in, fan_out):
    lim = (6.0 / (fan_in + fan_out)) ** 0.5
    return jax.random.uniform(k, shape, jnp.float32, -lim, lim)

  ks = jax.random.split(key, 6)
  H = hidden_channels
  return {
      'W_rel': uinit(ks[0], (number_of_features, H), number_of_features, H),
      'W_root': uinit(ks[1], (number_of_features, H), number_of_features, H),
      'b_rel': uinit(ks[2], (H,), number_of_features, H),
      'lin_W': uinit(ks[3], (H, number_of_classes), H, number_of_classes),
      'lin_b': uinit(ks[4], (number_of_classes,), H, number_of_classes),
  }


# ----------------------------------------------------------------------------

if __name__ == "__main__":
  key = jax.random.PRNGKey(0)
  k_param, k_x = jax.random.split(key)

  hidden_channels = 64
  number_of_features = 4
  number_of_classes = 3
  num_graphs = 2
  nodes_per_graph = 8
  N = num_graphs * nodes_per_graph

  params = make_params(k_param, hidden_channels, number_of_features,
                       number_of_classes)

  x = jax.random.normal(k_x, (N, number_of_features), jnp.float32)
  batch = jnp.array([g for g in range(num_graphs)
                     for _ in range(nodes_per_graph)], jnp.int32)

  # Undirected ring within each graph.
  src, dst = [], []
  for g in range(num_graphs):
    base = g * nodes_per_graph
    for i in range(nodes_per_graph):
      a = base + i
      b = base + (i + 1) % nodes_per_graph
      src += [a, b]
      dst += [b, a]
  edge_index = jnp.array([src, dst], jnp.int32)     # [2, 32]

  fwd = functools.partial(gcnss_forward, num_graphs=num_graphs)
  out = jax.block_until_ready(fwd(params, x, edge_index, batch))

  ref = gcnss_reference(params, x, edge_index, batch, num_graphs)

  assert out.shape == (num_graphs, number_of_classes)
  assert bool(jnp.all(jnp.isfinite(out)))
  # bf16 adjacency / (x @ W_rel) operands on the MXU -> loose tolerance vs f32.
  assert bool(jnp.allclose(out, ref, atol=5e-2, rtol=5e-2))
  print("KERNEL_OK")
</pallas_src>

<mosaic_0001>
module attributes {stable_mosaic.version = 11 : i64} {
  func.func @_gcnss_kernel(%arg0: i32, %arg1: i32, %arg2: memref<1xi32, #tpu.memory_space<smem>>, %arg3: memref<1xi32, #tpu.memory_space<smem>>, %arg4: memref<16x128xbf16, #tpu.memory_space<vmem>>, %arg5: memref<128x64xbf16, #tpu.memory_space<vmem>>, %arg6: memref<8x16xf32, #tpu.memory_space<vmem>>, %arg7: memref<64x3xf32, #tpu.memory_space<vmem>>, %arg8: memref<8x3xf32, #tpu.memory_space<vmem>>, %arg9: memref<8x3xf32, #tpu.memory_space<vmem>>, %arg10: memref<16x64xf32, #tpu.memory_space<vmem>>, %arg11: memref<8x64xf32, #tpu.memory_space<vmem>>) attributes {dimension_semantics = [#tpu.dimension_semantics<arbitrary>, #tpu.dimension_semantics<arbitrary>], iteration_bounds = array<i64: 1, 1>, scalar_prefetch = 2 : i64, scratch_operands = 2 : i64, tpu.core_type = #tpu.core_type<tc>, window_params = [{transform_indices = @transform_0, window_bounds = array<i64: 16, 128>}, {transform_indices = @transform_1, window_bounds = array<i64: 128, 64>}, {transform_indices = @transform_2, window_bounds = array<i64: 8, 16>}, {pipeline_mode = #tpu.pipeline_mode<synchronous>, transform_indices = @transform_3, window_bounds = array<i64: 64, 3>}, {pipeline_mode = #tpu.pipeline_mode<synchronous>, transform_indices = @transform_4, window_bounds = array<i64: 8, 3>}, {pipeline_mode = #tpu.pipeline_mode<synchronous>, transform_indices = @transform_5, window_bounds = array<i64: 8, 3>}]} {
    %c0_i32 = arith.constant 0 : i32
    %0 = arith.cmpi eq, %arg0, %c0_i32 : i32
    %c0_i32_0 = arith.constant 0 : i32
    %1 = arith.cmpi eq, %arg1, %c0_i32_0 : i32
    %2 = arith.andi %0, %1 : i1
    %3 = arith.extui %2 : i1 to i32
    %c0_i32_1 = arith.constant 0 : i32
    %4 = arith.cmpi ne, %3, %c0_i32_1 : i32
    scf.if %4 {
      %cst = arith.constant 0.000000e+00 : f32
      %21 = vector.broadcast %cst : f32 to vector<8x64xf32>
      %c0 = arith.constant 0 : index
      %c0_10 = arith.constant 0 : index
      %22 = vector.load %arg11[%c0, %c0_10] : memref<8x64xf32, #tpu.memory_space<vmem>>, vector<8x64xf32>
      tpu.vector_store %arg11[%c0, %c0_10], %21 {strides = array<i32>} : memref<8x64xf32, #tpu.memory_space<vmem>>, vector<8x64xf32>,
    } else {
    }
    %c0_i32_2 = arith.constant 0 : i32
    %5 = arith.cmpi eq, %arg1, %c0_i32_2 : i32
    %6 = arith.extui %5 : i1 to i32
    %c0_i32_3 = arith.constant 0 : i32
    %7 = arith.cmpi ne, %6, %c0_i32_3 : i32
    scf.if %7 {
      %cst = arith.constant 0.000000e+00 : f32
      %21 = vector.broadcast %cst : f32 to vector<16x64xf32>
      %c0 = arith.constant 0 : index
      %c0_10 = arith.constant 0 : index
      %22 = vector.load %arg10[%c0, %c0_10] : memref<16x64xf32, #tpu.memory_space<vmem>>, vector<16x64xf32>
      tpu.vector_store %arg10[%c0, %c0_10], %21 {strides = array<i32>} : memref<16x64xf32, #tpu.memory_space<vmem>>, vector<16x64xf32>,
    } else {
    }
    %8 = arith.index_cast %arg0 : i32 to index
    %9 = memref.load %arg3[%8] : memref<1xi32, #tpu.memory_space<smem>>
    %10 = arith.cmpi slt, %arg1, %9 : i32
    %11 = arith.extui %10 : i1 to i32
    %c0_i32_4 = arith.constant 0 : i32
    %12 = arith.cmpi ne, %11, %c0_i32_4 : i32
    scf.if %12 {
      %c0 = arith.constant 0 : index
      %c0_10 = arith.constant 0 : index
      %21 = vector.load %arg10[%c0, %c0_10] : memref<16x64xf32, #tpu.memory_space<vmem>>, vector<16x64xf32>
      %c0_11 = arith.constant 0 : index
      %c0_12 = arith.constant 0 : index
      %22 = vector.load %arg4[%c0_11, %c0_12] : memref<16x128xbf16, #tpu.memory_space<vmem>>, vector<16x128xbf16>
      %c0_13 = arith.constant 0 : index
      %c0_14 = arith.constant 0 : index
      %23 = vector.load %arg5[%c0_13, %c0_14] : memref<128x64xbf16, #tpu.memory_space<vmem>>, vector<128x64xbf16>
      %cst = arith.constant dense<0.000000e+00> : vector<16x64xf32>
      %24 = tpu.matmul %22, %23, %cst {dimension_numbers = #tpu.dot_dimension_numbers<[1], [0], [0], [1], [0, 0, 1, 1], [], []>} : vector<16x128xbf16>, vector<128x64xbf16>, vector<16x64xf32> -> vector<16x64xf32>
      %25 = arith.addf %21, %24 : vector<16x64xf32>
      %c0_15 = arith.constant 0 : index
      %c0_16 = arith.constant 0 : index
      %26 = vector.load %arg10[%c0_15, %c0_16] : memref<16x64xf32, #tpu.memory_space<vmem>>, vector<16x64xf32>
      tpu.vector_store %arg10[%c0_15, %c0_16], %25 {strides = array<i32>} : memref<16x64xf32, #tpu.memory_space<vmem>>, vector<16x64xf32>,
    } else {
    }
    %c0_i32_5 = arith.constant 0 : i32
    %13 = arith.cmpi eq, %arg1, %c0_i32_5 : i32
    %14 = arith.extui %13 : i1 to i32
    %c0_i32_6 = arith.constant 0 : i32
    %15 = arith.cmpi ne, %14, %c0_i32_6 : i32
    scf.if %15 {
      %c0 = arith.constant 0 : index
      %c0_10 = arith.constant 0 : index
      %21 = vector.load %arg11[%c0, %c0_10] : memref<8x64xf32, #tpu.memory_space<vmem>>, vector<8x64xf32>
      %c0_11 = arith.constant 0 : index
      %c0_12 = arith.constant 0 : index
      %22 = vector.load %arg6[%c0_11, %c0_12] : memref<8x16xf32, #tpu.memory_space<vmem>>, vector<8x16xf32>
      %c0_13 = arith.constant 0 : index
      %c0_14 = arith.constant 0 : index
      %23 = vector.load %arg10[%c0_13, %c0_14] : memref<16x64xf32, #tpu.memory_space<vmem>>, vector<16x64xf32>
      %cst = arith.constant dense<0.000000e+00> : vector<8x64xf32>
      %24 = tpu.matmul %22, %23, %cst {dimension_numbers = #tpu.dot_dimension_numbers<[1], [0], [0], [1], [0, 0, 1, 1], [], []>} : vector<8x16xf32>, vector<16x64xf32>, vector<8x64xf32> -> vector<8x64xf32>
      %25 = arith.addf %21, %24 : vector<8x64xf32>
      %c0_15 = arith.constant 0 : index
      %c0_16 = arith.constant 0 : index
      %26 = vector.load %arg11[%c0_15, %c0_16] : memref<8x64xf32, #tpu.memory_space<vmem>>, vector<8x64xf32>
      tpu.vector_store %arg11[%c0_15, %c0_16], %25 {strides = array<i32>} : memref<8x64xf32, #tpu.memory_space<vmem>>, vector<8x64xf32>,
    } else {
    }
    %c0_i32_7 = arith.constant 0 : i32
    %16 = arith.cmpi eq, %arg0, %c0_i32_7 : i32
    %c0_i32_8 = arith.constant 0 : i32
    %17 = arith.cmpi eq, %arg1, %c0_i32_8 : i32
    %18 = arith.andi %16, %17 : i1
    %19 = arith.extui %18 : i1 to i32
    %c0_i32_9 = arith.constant 0 : i32
    %20 = arith.cmpi ne, %19, %c0_i32_9 : i32
    scf.if %20 {
      %c0 = arith.constant 0 : index
      %c0_10 = arith.constant 0 : index
      %21 = vector.load %arg11[%c0, %c0_10] : memref<8x64xf32, #tpu.memory_space<vmem>>, vector<8x64xf32>
      %c0_11 = arith.constant 0 : index
      %c0_12 = arith.constant 0 : index
      %22 = vector.load %arg7[%c0_11, %c0_12] : memref<64x3xf32, #tpu.memory_space<vmem>>, vector<64x3xf32>
      %cst = arith.constant dense<0.000000e+00> : vector<8x3xf32>
      %23 = tpu.matmul %21, %22, %cst {dimension_numbers = #tpu.dot_dimension_numbers<[1], [0], [0], [1], [0, 0, 1, 1], [], []>} : vector<8x64xf32>, vector<64x3xf32>, vector<8x3xf32> -> vector<8x3xf32>
      %c0_13 = arith.constant 0 : index
      %c0_14 = arith.constant 0 : index
      %24 = vector.load %arg8[%c0_13, %c0_14] : memref<8x3xf32, #tpu.memory_space<vmem>>, vector<8x3xf32>
      %25 = arith.addf %23, %24 : vector<8x3xf32>
      %c0_15 = arith.constant 0 : index
      %c0_16 = arith.constant 0 : index
      %26 = vector.load %arg9[%c0_15, %c0_16] : memref<8x3xf32, #tpu.memory_space<vmem>>, vector<8x3xf32>
      tpu.vector_store %arg9[%c0_15, %c0_16], %25 {strides = array<i32>} : memref<8x3xf32, #tpu.memory_space<vmem>>, vector<8x3xf32>,
    } else {
    }
    return
  }
  func.func @transform_0(%arg0: i32, %arg1: i32, %arg2: memref<1xi32, #tpu.memory_space<smem>>, %arg3: memref<1xi32, #tpu.memory_space<smem>>) -> (i32, i32) {
    %c1_i32 = arith.constant 1 : i32
    %0 = arith.muli %arg0, %c1_i32 : i32
    %1 = arith.addi %0, %arg1 : i32
    %2 = arith.index_cast %1 : i32 to index
    %3 = memref.load %arg2[%2] : memref<1xi32, #tpu.memory_space<smem>>
    %c0_i32 = arith.constant 0 : i32
    return %arg0, %3 : i32, i32
  }
  func.func @transform_1(%arg0: i32, %arg1: i32, %arg2: memref<1xi32, #tpu.memory_space<smem>>, %arg3: memref<1xi32, #tpu.memory_space<smem>>) -> (i32, i32) {
    %c1_i32 = arith.constant 1 : i32
    %0 = arith.muli %arg0, %c1_i32 : i32
    %1 = arith.addi %0, %arg1 : i32
    %2 = arith.index_cast %1 : i32 to index
    %3 = memref.load %arg2[%2] : memref<1xi32, #tpu.memory_space<smem>>
    %c0_i32 = arith.constant 0 : i32
    %c0_i32_0 = arith.constant 0 : i32
    return %3, %c0_i32 : i32, i32
  }
  func.func @transform_2(%arg0: i32, %arg1: i32, %arg2: memref<1xi32, #tpu.memory_space<smem>>, %arg3: memref<1xi32, #tpu.memory_space<smem>>) -> (i32, i32) {
    %c0_i32 = arith.constant 0 : i32
    %c0_i32_0 = arith.constant 0 : i32
    return %c0_i32, %arg0 : i32, i32
  }
  func.func @transform_3(%arg0: i32, %arg1: i32, %arg2: memref<1xi32, #tpu.memory_space<smem>>, %arg3: memref<1xi32, #tpu.memory_space<smem>>) -> (i32, i32) {
    %c0_i32 = arith.constant 0 : i32
    %c0_i32_0 = arith.constant 0 : i32
    %c0_i32_1 = arith.constant 0 : i32
    return %c0_i32, %c0_i32_0 : i32, i32
  }
  func.func @transform_4(%arg0: i32, %arg1: i32, %arg2: memref<1xi32, #tpu.memory_space<smem>>, %arg3: memref<1xi32, #tpu.memory_space<smem>>) -> (i32, i32) {
    %c0_i32 = arith.constant 0 : i32
    %c0_i32_0 = arith.constant 0 : i32
    %c0_i32_1 = arith.constant 0 : i32
    return %c0_i32, %c0_i32_0 : i32, i32
  }
  func.func @transform_5(%arg0: i32, %arg1: i32, %arg2: memref<1xi32, #tpu.memory_space<smem>>, %arg3: memref<1xi32, #tpu.memory_space<smem>>) -> (i32, i32) {
    %c0_i32 = arith.constant 0 : i32
    %c0_i32_0 = arith.constant 0 : i32
    %c0_i32_1 = arith.constant 0 : i32
    return %c0_i32, %c0_i32_0 : i32, i32
  }
}

</mosaic_0001>

<llo_original>
// kernel: tpu_custom_call.1
$region0: #{tpu_custom_call.1}
  #allocation0 [shape = 'u32[]', space=smem, size = 0x4, offset = 0x4, fixed_abs, tag = 'smem constant byte address 0x4 - core index']
  #allocation1 [shape = 'u32[144,128]{1,0:T(1,128)}', space=vmem, size = 0x12000, scoped, tag = 'internal scratch']
  #allocation2 [shape = 'f32[16,64]{1,0:T(8,128)}', space=vmem, size = 0x2000, scoped, tag = 'scratch operand']
  #allocation3 [shape = 'f32[8,64]{1,0:T(8,128)}', space=vmem, size = 0x1000, scoped, tag = 'scratch operand']
  #allocation4 [shape = 's32[1]{0}', space=sflag, size = 0x4, scoped, tag = 'scoped memory for tpu_custom_call.1']
  #allocation5 [shape = 's32[1]{0:T(128)S(6)}', space=smem, size = 0x200, scoped, tag = 'prefetched SMEM operand 0']
  #allocation6 [shape = 's32[1]{0:T(128)S(6)}', space=smem, size = 0x200, scoped, tag = 'prefetched SMEM operand 1']
  %s0 = inlined_call_operand.<no memory space> [shape: s32[1], index: 0, kind: input, shape index: {}]
  %s1 = inlined_call_operand.<no memory space> [shape: s32[1], index: 1, kind: input, shape index: {}]
  %s2 = inlined_call_operand.hbm [shape: bf16[16,128], index: 2, kind: input, shape index: {}]
  %s3 = inlined_call_operand.hbm [shape: bf16[128,64], index: 3, kind: input, shape index: {}]
  %s4 = inlined_call_operand.hbm [shape: f32[8,16], index: 4, kind: input, shape index: {}]
  %s5 = inlined_call_operand.hbm [shape: f32[64,3], index: 5, kind: input, shape index: {}]
  %s6 = inlined_call_operand.hbm [shape: f32[8,3], index: 6, kind: input, shape index: {}]
  %s7 = inlined_call_operand.hbm [shape: f32[8,3], index: 7, kind: output, shape index: {}]
  %s8 = sld [smem:[#allocation0]]
  $region70: #{tpu_custom_call.1} parent=0
    _
  %s10 = ssub.s32 1, %s8
  %s11 = scalar_select 0, %s10, %s8
  %12 = sst [smem:[#allocation5]] %s0
  %13 = sst [smem:[#allocation6]] %s1
  $region1: #{tpu_custom_call.1} parent=0
    #allocation7 [shape = 'u8[4096]{0}', space=vmem, size = 0x1000, scoped, tag = 'input window, operand 2, single buffered']
    #allocation8 [shape = 's32[1]{0}', space=sflag, size = 0x4, scoped, tag = 'scoped memory for tpu_custom_call.1']
    #allocation9 [shape = 's32[1]{0}', space=sflag, size = 0x4, scoped, tag = 'scoped memory for tpu_custom_call.1']
    #allocation10 [shape = 'u8[32768]{0}', space=vmem, size = 0x8000, scoped, tag = 'input window, operand 3, single buffered']
    #allocation11 [shape = 's32[1]{0}', space=sflag, size = 0x4, scoped, tag = 'scoped memory for tpu_custom_call.1']
    #allocation12 [shape = 'u8[4096]{0}', space=vmem, size = 0x1000, scoped, tag = 'input window, operand 4, single buffered']
    #allocation13 [shape = 'u8[32768]{0}', space=vmem, size = 0x8000, scoped, tag = 'input window, operand 5, single buffered']
    #allocation14 [shape = 's32[1]{0}', space=sflag, size = 0x4, scoped, tag = 'scoped memory for tpu_custom_call.1']
    #allocation15 [shape = 'u8[4096]{0}', space=vmem, size = 0x1000, scoped, tag = 'input window, operand 6, single buffered']
    #allocation16 [shape = 'u8[4096]{0}', space=vmem, size = 0x1000, scoped, tag = 'output window, operand 0, single buffered']
    %14 = vsyncpa [#allocation8], 0
    %15 = vsyncpa [#allocation11], 0
    %16 = vsyncpa [#allocation14], 0
    %17 = vsyncpa [#allocation9], 0
    // Predicated region
    $region2: #{tpu_custom_call.1} parent=1 // pred_check
      _
    $region3: #{tpu_custom_call.1} parent=1 // pred_check_branch
      %19 = sbr.rel (0) target = $region5
    $region4: #{tpu_custom_call.1} parent=1 // pred_region
      %s20 = sadd.s32 0, 0
      %s21 = sld [smem:[#allocation5 + %s20]]
      %s23 = ssub.s32 128, 128
      %24 = vsyncadd [#allocation8], %s23
      %s25 = smul.addr %s21, 64
      %s26 = scalar_lea.hbm %s2, %s25
      %s27 = sshll.u32 [#allocation7], 4
      %s28 = int_to_ptr.vmem [resolvable:$true] %s27
      %33 = dma.hbm_to_vmem [thread:$0]  %s26, 128, %s28, [#allocation8], 64, 64, 4
    $region5: #{tpu_custom_call.1} parent=1 // pred_fallthru
      _
    // Predicated region
    $region6: #{tpu_custom_call.1} parent=1 // pred_check
      _
    $region7: #{tpu_custom_call.1} parent=1 // pred_check_branch
      %35 = sbr.rel (0) target = $region9
    $region8: #{tpu_custom_call.1} parent=1 // pred_region
      %s36 = sadd.s32 0, 0
      %s37 = sld [smem:[#allocation5 + %s36]]
      %s38 = smul.u32 16, %s37
      %s40 = ssub.s32 1024, 1024
      %41 = vsyncadd [#allocation11], %s40
      %s42 = smul.addr %s38, 64
      %s43 = scalar_lea.hbm %s3, %s42
      %s44 = sshll.u32 [#allocation10], 4
      %s45 = int_to_ptr.vmem [resolvable:$true] %s44
      %50 = dma.hbm_to_vmem [thread:$0]  %s43, 1024, %s45, [#allocation11], 64, 64, 4
    $region9: #{tpu_custom_call.1} parent=1 // pred_fallthru
      _
    // Predicated region
    $region10: #{tpu_custom_call.1} parent=1 // pred_check
      _
    $region11: #{tpu_custom_call.1} parent=1 // pred_check_branch
      %52 = sbr.rel (0) target = $region13
    $region12: #{tpu_custom_call.1} parent=1 // pred_region
      %s54 = ssub.s32 128, 128
      %55 = vsyncadd [#allocation11], %s54
      %s57 = sshll.u32 [#allocation12], 4
      %s58 = int_to_ptr.vmem [resolvable:$true] %s57
      %60 = dma.hbm_to_vmem [thread:$0]  %s4, 128, %s58, [#allocation11]
    $region13: #{tpu_custom_call.1} parent=1 // pred_fallthru
      _
    // Predicated region
    $region14: #{tpu_custom_call.1} parent=1 // pred_check
      _
    $region15: #{tpu_custom_call.1} parent=1 // pred_check_branch
      %62 = sbr.rel (0) target = $region17
    $region16: #{tpu_custom_call.1} parent=1 // pred_region
      %s64 = ssub.s32 1024, 1024
      %65 = vsyncadd [#allocation14], %s64
      %s66 = sshll.u32 [#allocation13], 4
      %s67 = int_to_ptr.vmem [resolvable:$true] %s66
      %72 = dma.hbm_to_vmem [thread:$0]  %s5, 1024, %s67, [#allocation14], 128, 128, 8
    $region17: #{tpu_custom_call.1} parent=1 // pred_fallthru
      _
    // Predicated region
    $region18: #{tpu_custom_call.1} parent=1 // pred_check
      _
    $region19: #{tpu_custom_call.1} parent=1 // pred_check_branch
      %74 = sbr.rel (0) target = $region21
    $region20: #{tpu_custom_call.1} parent=1 // pred_region
      %s76 = ssub.s32 128, 128
      %77 = vsyncadd [#allocation14], %s76
      %s79 = sshll.u32 [#allocation15], 4
      %s80 = int_to_ptr.vmem [resolvable:$true] %s79
      %82 = dma.hbm_to_vmem [thread:$0]  %s6, 128, %s80, [#allocation14]
    $region21: #{tpu_custom_call.1} parent=1 // pred_fallthru
      _
    // Predicated region
    $region22: #{tpu_custom_call.1} parent=1 // pred_check
      _
    $region23: #{tpu_custom_call.1} parent=1 // pred_check_branch
      %84 = sbr.rel (0) target = $region25
    $region24: #{tpu_custom_call.1} parent=1 // pred_region
      %85 = dma.done [#allocation8], 128
    $region25: #{tpu_custom_call.1} parent=1 // pred_fallthru
      _
    // Predicated region
    $region26: #{tpu_custom_call.1} parent=1 // pred_check
      _
    $region27: #{tpu_custom_call.1} parent=1 // pred_check_branch
      %87 = sbr.rel (0) target = $region29
    $region28: #{tpu_custom_call.1} parent=1 // pred_region
      %88 = dma.done [#allocation11], 1024
    $region29: #{tpu_custom_call.1} parent=1 // pred_fallthru
      _
    // Predicated region
    $region30: #{tpu_custom_call.1} parent=1 // pred_check
      _
    $region31: #{tpu_custom_call.1} parent=1 // pred_check_branch
      %90 = sbr.rel (0) target = $region33
    $region32: #{tpu_custom_call.1} parent=1 // pred_region
      %91 = dma.done [#allocation11], 128
    $region33: #{tpu_custom_call.1} parent=1 // pred_fallthru
      _
    // Predicated region
    $region34: #{tpu_custom_call.1} parent=1 // pred_check
      _
    $region35: #{tpu_custom_call.1} parent=1 // pred_check_branch
      %93 = sbr.rel (0) target = $region37
    $region36: #{tpu_custom_call.1} parent=1 // pred_region
      %94 = dma.done [#allocation14], 1024
    $region37: #{tpu_custom_call.1} parent=1 // pred_fallthru
      _
    // Predicated region
    $region38: #{tpu_custom_call.1} parent=1 // pred_check
      _
    $region39: #{tpu_custom_call.1} parent=1 // pred_check_branch
      %96 = sbr.rel (0) target = $region41
    $region40: #{tpu_custom_call.1} parent=1 // pred_region
      %97 = dma.done [#allocation14], 128
    $region41: #{tpu_custom_call.1} parent=1 // pred_fallthru
      _
    %s98 = sadd.s32 0, 0
    %s99 = sld [smem:[#allocation5 + %s98]]
    %s100 = sadd.s32 0, 0
    %s101 = sld [smem:[#allocation5 + %s100]]
    %s102 = smul.u32 16, %s101
    %p104 = scmp.eq.s32.totalorder 0, 0
    %p105 = scmp.eq.s32.totalorder 0, 0
    %p106 = pnand %p104, %p105
    %p107 = pneg %p106
    // Predicated region
    $region42: #{tpu_custom_call.1} parent=1 // pred_check
      _
    $region43: #{tpu_custom_call.1} parent=1 // pred_check_branch
      %109 = sbr.rel (%p106) target = $region45
    $region44: #{tpu_custom_call.1} parent=1 // pred_region
      %vm110 = vcmask 523264
      %111 = vst.msk [vmem:[#allocation3] sm:$0xff] %vm110, 0.0
    $region45: #{tpu_custom_call.1} parent=1 // pred_fallthru
      _
    // Predicated region
    $region46: #{tpu_custom_call.1} parent=1 // pred_check
      %p112 = pneg %p105
    $region47: #{tpu_custom_call.1} parent=1 // pred_check_branch
      %114 = sbr.rel (%p112) target = $region49
    $region48: #{tpu_custom_call.1} parent=1 // pred_region
      %vm115 = vcmask 523264
      %116 = vst.msk [vmem:[#allocation2] sm:$0xff] %vm115, 0.0
      %117 = vst.msk [vmem:[#allocation2 + $0x8] sm:$0xff] %vm115, 0.0
    $region49: #{tpu_custom_call.1} parent=1 // pred_fallthru
      _
    %s118 = sld [smem:[#allocation6]]
    %p119 = scmp.lt.s32.totalorder 0, %s118
    // Predicated region
    $region50: #{tpu_custom_call.1} parent=1 // pred_check
      %p120 = pneg %p119
    $region51: #{tpu_custom_call.1} parent=1 // pred_check_branch
      %122 = sbr.rel (%p120) target = $region53
    $region52: #{tpu_custom_call.1} parent=1 // pred_region
      %v123 = vld [vmem:[#allocation2] sm:$0xff]
      %v124 = vld [vmem:[#allocation2 + $0x8] sm:$0xff]
      %v125 = vld [vmem:[#allocation7] sm:$0xf]
      %v126 = vld [vmem:[#allocation7 + $0x4] sm:$0xf]
      %v127 = vld [vmem:[#allocation10] sm:$0xf]
      %v128 = vld [vmem:[#allocation10 + $0x4] sm:$0xf]
      %v129 = vld [vmem:[#allocation10 + $0x8] sm:$0xf]
      %v130 = vld [vmem:[#allocation10 + $0xc] sm:$0xf]
      %v131 = vld [vmem:[#allocation10 + $0x10] sm:$0xf]
      %v132 = vld [vmem:[#allocation10 + $0x14] sm:$0xf]
      %v133 = vld [vmem:[#allocation10 + $0x18] sm:$0xf]
      %v134 = vld [vmem:[#allocation10 + $0x1c] sm:$0xf]
      %v135 = vld [vmem:[#allocation10 + $0x20] sm:$0xf]
      %v136 = vld [vmem:[#allocation10 + $0x24] sm:$0xf]
      %v137 = vld [vmem:[#allocation10 + $0x28] sm:$0xf]
      %v138 = vld [vmem:[#allocation10 + $0x2c] sm:$0xf]
      %v139 = vld [vmem:[#allocation10 + $0x30] sm:$0xf]
      %v140 = vld [vmem:[#allocation10 + $0x34] sm:$0xf]
      %v141 = vld [vmem:[#allocation10 + $0x38] sm:$0xf]
      %v142 = vld [vmem:[#allocation10 + $0x3c] sm:$0xf]
      %v145 = vunpack.c.l.b16 %v125
      %v146 = vunpack.c.l.b16 %v126
      %v147 = vpack.c.b16 %v146, %v145
      %v165 = vunpack.c.l.b16 %v127
      %v166 = vunpack.c.l.b16 %v128
      %v167 = vunpack.c.l.b16 %v129
      %v168 = vunpack.c.l.b16 %v130
      %v169 = vunpack.c.l.b16 %v131
      %v170 = vunpack.c.l.b16 %v132
      %v171 = vunpack.c.l.b16 %v133
      %v172 = vunpack.c.l.b16 %v134
      %v173 = vunpack.c.l.b16 %v135
      %v174 = vunpack.c.l.b16 %v136
      %v175 = vunpack.c.l.b16 %v137
      %v176 = vunpack.c.l.b16 %v138
      %v177 = vunpack.c.l.b16 %v139
      %v178 = vunpack.c.l.b16 %v140
      %v179 = vunpack.c.l.b16 %v141
      %v180 = vunpack.c.l.b16 %v142
      %v181 = vpack.c.b16 %v166, %v165
      %v182 = vpack.c.b16 %v168, %v167
      %v183 = vpack.c.b16 %v170, %v169
      %v184 = vpack.c.b16 %v172, %v171
      %v185 = vpack.c.b16 %v174, %v173
      %v186 = vpack.c.b16 %v176, %v175
      %v187 = vpack.c.b16 %v178, %v177
      %v188 = vpack.c.b16 %v180, %v179
      %197 = vmatprep.subr.bf16.mxu0 0
      %198 = vmatpush1.bf16.msra.mxu0 %v181
      %199 = vmatprep.subr.bf16.mxu0 0
      %200 = vmatpush1.bf16.msra.mxu0 %v182
      %201 = vmatprep.subr.bf16.mxu0 0
      %202 = vmatpush1.bf16.msra.mxu0 %v183
      %203 = vmatprep.subr.bf16.mxu0 0
      %204 = vmatpush1.bf16.msra.mxu0 %v184
      %205 = vmatprep.subr.bf16.mxu0 0
      %206 = vmatpush1.bf16.msra.mxu0 %v185
      %207 = vmatprep.subr.bf16.mxu0 0
      %208 = vmatpush1.bf16.msra.mxu0 %v186
      %209 = vmatprep.subr.bf16.mxu0 0
      %210 = vmatpush1.bf16.msra.mxu0 %v187
      %211 = vmatprep.subr.bf16.mxu0 0
      %212 = vmatpush1.bf16.msra.mxu0 %v188
      %213 = vmatprep.subr.bf16.mxu0 0
      %214 = vmatpush1.bf16.msra.mxu0 0
      %215 = vmatprep.subr.bf16.mxu0 0
      %216 = vmatpush1.bf16.msra.mxu0 0
      %217 = vmatprep.subr.bf16.mxu0 0
      %218 = vmatpush1.bf16.msra.mxu0 0
      %219 = vmatprep.subr.bf16.mxu0 0
      %220 = vmatpush1.bf16.msra.mxu0 0
      %221 = vmatprep.subr.bf16.mxu0 0
      %222 = vmatpush1.bf16.msra.mxu0 0
      %223 = vmatprep.subr.bf16.mxu0 0
      %224 = vmatpush1.bf16.msra.mxu0 0
      %225 = vmatprep.subr.bf16.mxu0 0
      %226 = vmatpush1.bf16.msra.mxu0 0
      %227 = vmatprep.subr.bf16.mxu0 0
      %228 = vmatpush1.bf16.msra.mxu0 0
      %229 = vmatprep.mubr.bf16.mxu0 0
      %230 = vmatmul.mubr.bf16.gmra.mrb[0].mxu0 %v147
      %v231 = vpop.f32.mrb[0].mxu0
      %v232 = vadd.f32 0.0, %v231
      %v233 = vpop.f32.mrb[0].mxu0
      %v234 = vpop.f32.mrb[0].mxu0
      %v235 = vadd.f32 0.0, %v234
      %v236 = vpop.f32.mrb[0].mxu0
      %237 = vdwg.mxu0
      %v238 = vadd.f32 %v123, %v232
      %v239 = vadd.f32 %v124, %v235
      %vm240 = vcmask 523264
      %241 = vst.msk [vmem:[#allocation2] sm:$0xff] %vm240, %v238
      %242 = vst.msk [vmem:[#allocation2 + $0x8] sm:$0xff] %vm240, %v239
    $region53: #{tpu_custom_call.1} parent=1 // pred_fallthru
      _
    // Predicated region
    $region54: #{tpu_custom_call.1} parent=1 // pred_check
      %p243 = pneg %p105
    $region55: #{tpu_custom_call.1} parent=1 // pred_check_branch
      %245 = sbr.rel (%p243) target = $region57
    $region56: #{tpu_custom_call.1} parent=1 // pred_region
      %v246 = vld [vmem:[#allocation3] sm:$0xff]
      %v247 = vld [vmem:[#allocation12] sm:$0xff]
      %v248 = vld [vmem:[#allocation2] sm:$0xff]
      %v249 = vld [vmem:[#allocation2 + $0x8] sm:$0xff]
      %vm250 = vcmask 130048
      %v252 = vsel %vm250, %v247, 0
      %254 = vmatprep.subr.mxu0 0.0
      %255 = vmatpush1.msra.mxu0 %v248
      %256 = vmatprep.subr.mxu0 0.0
      %257 = vmatpush1.msra.mxu0 %v249
      %258 = vmatprep.subr.mxu0 0.0
      %259 = vmatpush1.msra.mxu0 0.0
      %260 = vmatprep.subr.mxu0 0.0
      %261 = vmatpush1.msra.mxu0 0.0
      %262 = vmatprep.subr.mxu0 0.0
      %263 = vmatpush1.msra.mxu0 0.0
      %264 = vmatprep.subr.mxu0 0.0
      %265 = vmatpush1.msra.mxu0 0.0
      %266 = vmatprep.subr.mxu0 0.0
      %267 = vmatpush1.msra.mxu0 0.0
      %268 = vmatprep.subr.mxu0 0.0
      %269 = vmatpush1.msra.mxu0 0.0
      %270 = vmatprep.subr.mxu0 0.0
      %271 = vmatpush1.msra.mxu0 0.0
      %272 = vmatprep.subr.mxu0 0.0
      %273 = vmatpush1.msra.mxu0 0.0
      %274 = vmatprep.subr.mxu0 0.0
      %275 = vmatpush1.msra.mxu0 0.0
      %276 = vmatprep.subr.mxu0 0.0
      %277 = vmatpush1.msra.mxu0 0.0
      %278 = vmatprep.subr.mxu0 0.0
      %279 = vmatpush1.msra.mxu0 0.0
      %280 = vmatprep.subr.mxu0 0.0
      %281 = vmatpush1.msra.mxu0 0.0
      %282 = vmatprep.subr.mxu0 0.0
      %283 = vmatpush1.msra.mxu0 0.0
      %284 = vmatprep.subr.mxu0 0.0
      %285 = vmatpush1.msra.mxu0 0.0
      %286 = vmatprep.subr.mxu0 0.0
      %287 = vmatpush1.msra.mxu0 0.0
      %288 = vmatprep.subr.mxu0 0.0
      %289 = vmatpush1.msra.mxu0 0.0
      %290 = vmatprep.subr.mxu0 0.0
      %291 = vmatpush1.msra.mxu0 0.0
      %292 = vmatprep.subr.mxu0 0.0
      %293 = vmatpush1.msra.mxu0 0.0
      %294 = vmatprep.subr.mxu0 0.0
      %295 = vmatpush1.msra.mxu0 0.0
      %296 = vmatprep.subr.mxu0 0.0
      %297 = vmatpush1.msra.mxu0 0.0
      %298 = vmatprep.subr.mxu0 0.0
      %299 = vmatpush1.msra.mxu0 0.0
      %300 = vmatprep.subr.mxu0 0.0
      %301 = vmatpush1.msra.mxu0 0.0
      %302 = vmatprep.subr.mxu0 0.0
      %303 = vmatpush1.msra.mxu0 0.0
      %304 = vmatprep.subr.mxu0 0.0
      %305 = vmatpush1.msra.mxu0 0.0
      %306 = vmatprep.subr.mxu0 0.0
      %307 = vmatpush1.msra.mxu0 0.0
      %308 = vmatprep.subr.mxu0 0.0
      %309 = vmatpush1.msra.mxu0 0.0
      %310 = vmatprep.subr.mxu0 0.0
      %311 = vmatpush1.msra.mxu0 0.0
      %312 = vmatprep.subr.mxu0 0.0
      %313 = vmatpush1.msra.mxu0 0.0
      %314 = vmatprep.subr.mxu0 0.0
      %315 = vmatpush1.msra.mxu0 0.0
      %316 = vmatprep.subr.mxu0 0.0
      %317 = vmatpush1.msra.mxu0 0.0
      %318 = vmatprep.mubr.f32.mxu0 0.0
      %319 = vmatmul.mubr.f32.gmra.mrb[0].mxu0 %v252
      %v320 = vpop.f32.mrb[0].mxu0
      %v321 = vadd.f32 0.0, %v320
      %v322 = vpop.f32.mrb[0].mxu0
      %323 = vdwg.mxu0
      %v324 = vadd.f32 %v246, %v321
      %vm325 = vcmask 523264
      %326 = vst.msk [vmem:[#allocation3] sm:$0xff] %vm325, %v324
    $region57: #{tpu_custom_call.1} parent=1 // pred_fallthru
      _
    // Predicated region
    $region58: #{tpu_custom_call.1} parent=1 // pred_check
      _
    $region59: #{tpu_custom_call.1} parent=1 // pred_check_branch
      %328 = sbr.rel (%p106) target = $region61
    $region60: #{tpu_custom_call.1} parent=1 // pred_region
      %v329 = vld [vmem:[#allocation3] sm:$0xff]
      %v330 = vld [vmem:[#allocation13] sm:$0xff]
      %v331 = vld [vmem:[#allocation13 + $0x8] sm:$0xff]
      %v332 = vld [vmem:[#allocation13 + $0x10] sm:$0xff]
      %v333 = vld [vmem:[#allocation13 + $0x18] sm:$0xff]
      %v334 = vld [vmem:[#allocation13 + $0x20] sm:$0xff]
      %v335 = vld [vmem:[#allocation13 + $0x28] sm:$0xff]
      %v336 = vld [vmem:[#allocation13 + $0x30] sm:$0xff]
      %v337 = vld [vmem:[#allocation13 + $0x38] sm:$0xff]
      %v338 = vld [vmem:[#allocation15] sm:$0xff]
      %vm339 = vcmask 523264
      %v341 = vsel %vm339, %v329, 0
      %343 = vmatprep.subr.mxu0 0.0
      %344 = vmatpush1.msra.mxu0 %v330
      %345 = vmatprep.subr.mxu0 0.0
      %346 = vmatpush1.msra.mxu0 %v331
      %347 = vmatprep.subr.mxu0 0.0
      %348 = vmatpush1.msra.mxu0 %v332
      %349 = vmatprep.subr.mxu0 0.0
      %350 = vmatpush1.msra.mxu0 %v333
      %351 = vmatprep.subr.mxu0 0.0
      %352 = vmatpush1.msra.mxu0 %v334
      %353 = vmatprep.subr.mxu0 0.0
      %354 = vmatpush1.msra.mxu0 %v335
      %355 = vmatprep.subr.mxu0 0.0
      %356 = vmatpush1.msra.mxu0 %v336
      %357 = vmatprep.subr.mxu0 0.0
      %358 = vmatpush1.msra.mxu0 %v337
      %359 = vmatprep.subr.mxu0 0.0
      %360 = vmatpush1.msra.mxu0 0.0
      %361 = vmatprep.subr.mxu0 0.0
      %362 = vmatpush1.msra.mxu0 0.0
      %363 = vmatprep.subr.mxu0 0.0
      %364 = vmatpush1.msra.mxu0 0.0
      %365 = vmatprep.subr.mxu0 0.0
      %366 = vmatpush1.msra.mxu0 0.0
      %367 = vmatprep.subr.mxu0 0.0
      %368 = vmatpush1.msra.mxu0 0.0
      %369 = vmatprep.subr.mxu0 0.0
      %370 = vmatpush1.msra.mxu0 0.0
      %371 = vmatprep.subr.mxu0 0.0
      %372 = vmatpush1.msra.mxu0 0.0
      %373 = vmatprep.subr.mxu0 0.0
      %374 = vmatpush1.msra.mxu0 0.0
      %375 = vmatprep.subr.mxu0 0.0
      %376 = vmatpush1.msra.mxu0 0.0
      %377 = vmatprep.subr.mxu0 0.0
      %378 = vmatpush1.msra.mxu0 0.0
      %379 = vmatprep.subr.mxu0 0.0
      %380 = vmatpush1.msra.mxu0 0.0
      %381 = vmatprep.subr.mxu0 0.0
      %382 = vmatpush1.msra.mxu0 0.0
      %383 = vmatprep.subr.mxu0 0.0
      %384 = vmatpush1.msra.mxu0 0.0
      %385 = vmatprep.subr.mxu0 0.0
      %386 = vmatpush1.msra.mxu0 0.0
      %387 = vmatprep.subr.mxu0 0.0
      %388 = vmatpush1.msra.mxu0 0.0
      %389 = vmatprep.subr.mxu0 0.0
      %390 = vmatpush1.msra.mxu0 0.0
      %391 = vmatprep.subr.mxu0 0.0
      %392 = vmatpush1.msra.mxu0 0.0
      %393 = vmatprep.subr.mxu0 0.0
      %394 = vmatpush1.msra.mxu0 0.0
      %395 = vmatprep.subr.mxu0 0.0
      %396 = vmatpush1.msra.mxu0 0.0
      %397 = vmatprep.subr.mxu0 0.0
      %398 = vmatpush1.msra.mxu0 0.0
      %399 = vmatprep.subr.mxu0 0.0
      %400 = vmatpush1.msra.mxu0 0.0
      %401 = vmatprep.subr.mxu0 0.0
      %402 = vmatpush1.msra.mxu0 0.0
      %403 = vmatprep.subr.mxu0 0.0
      %404 = vmatpush1.msra.mxu0 0.0
      %405 = vmatprep.subr.mxu0 0.0
      %406 = vmatpush1.msra.mxu0 0.0
      %407 = vmatprep.mubr.f32.mxu0 0.0
      %408 = vmatmul.mubr.f32.gmra.mrb[0].mxu0 %v341
      %v409 = vpop.f32.mrb[0].mxu0
      %v410 = vadd.f32 %v338, %v409
      %v411 = vpop.f32.mrb[0].mxu0
      %412 = vdwg.mxu0
      %vm413 = vcmask 23552
      %414 = vst.msk [vmem:[#allocation16] sm:$0xff] %vm413, %v410
    $region61: #{tpu_custom_call.1} parent=1 // pred_fallthru
      _
    // Predicated region
    $region62: #{tpu_custom_call.1} parent=1 // pred_check
      _
    $region63: #{tpu_custom_call.1} parent=1 // pred_check_branch
      %416 = sbr.rel (0) target = $region65
    $region64: #{tpu_custom_call.1} parent=1 // pred_region
      %s418 = ssub.s32 128, 128
      %419 = vsyncadd [#allocation9], %s418
      %s421 = sshll.u32 [#allocation16], 4
      %s422 = int_to_ptr.vmem [resolvable:$true] %s421
      %424 = dma.vmem_to_hbm [thread:$0]  %s422, 128, %s7, [#allocation9]
    $region65: #{tpu_custom_call.1} parent=1 // pred_fallthru
      _
    // Predicated region
    $region66: #{tpu_custom_call.1} parent=1 // pred_check
      _
    $region67: #{tpu_custom_call.1} parent=1 // pred_check_branch
      %426 = sbr.rel (0) target = $region69
    $region68: #{tpu_custom_call.1} parent=1 // pred_region
      %427 = dma.done [#allocation9], 128
    $region69: #{tpu_custom_call.1} parent=1 // pred_fallthru
      _
    %428 = vsyncpa [#allocation8], 1
    %429 = vsyncpa [#allocation11], 1
    %430 = vsyncpa [#allocation14], 1
    %431 = vsyncpa [#allocation9], 1

</llo_original>
